<compile_context>
chip_gen: v7x
topology: tpu7x:2x2x1
jax: 0.10.0
libtpu: 0.0.40
codegen_flags: <defaults>
</compile_context>

<pallas_src>
import functools

import jax
import jax.numpy as jnp
from jax.experimental import pallas as pl
from jax.experimental.pallas import tpu as pltpu


def _fc_block_kernel(x_ref, w_ref, b_ref, o_ref, *, group, ic_pg, oc_pg):
    # x_ref: (1, C_in, Lt)          one batch element, all channels, one L tile
    # w_ref: (group, oc_pg, ic_pg)  all weights, VMEM-resident for whole kernel
    # b_ref: (C_out, 1)             all biases
    # o_ref: (1, C_out, Lt)
    for g in range(group):  # static unroll; `group` is a small Python int
        xg = x_ref[0, g * ic_pg:(g + 1) * ic_pg, :]       # (ic_pg, Lt)
        wg = w_ref[g]                                     # (oc_pg, ic_pg)
        bg = b_ref[g * oc_pg:(g + 1) * oc_pg, :]          # (oc_pg, 1)
        acc = jnp.dot(wg, xg, preferred_element_type=jnp.float32)   # MXU
        o_ref[0, g * oc_pg:(g + 1) * oc_pg, :] = (acc + bg).astype(o_ref.dtype)


def _choose_l_tile(c_in, c_out, length, itemsize, vmem_budget_bytes):
    """Largest lane-aligned L tile whose double-buffered x+out tiles fit the budget."""
    per_lane = 2 * (c_in + c_out) * itemsize          # 2 bufs x (x tile + out tile)
    max_tile = max(128, (vmem_budget_bytes // per_lane) // 128 * 128)
    return length if length <= max_tile else max_tile


def fc_block_forward(x, weight, bias, group, *, vmem_budget_bytes=16 * 1024 * 1024):
    """Grouped 1x1 Conv1d forward (== nn.Conv1d(kernel_size=1, groups=group))."""
    n, c_in, length = x.shape
    c_out = weight.shape[0]
    assert c_in % group == 0 and c_out % group == 0
    ic_pg = c_in // group
    oc_pg = c_out // group

    # Glue: reshape params into per-group matrices (plain JAX, negligible cost).
    w_g = weight.reshape(group, oc_pg, ic_pg)    # (g, oc_pg, ic_pg)
    b_2d = bias.reshape(c_out, 1)                # (C_out, 1)

    itemsize = jnp.dtype(x.dtype).itemsize
    l_tile = _choose_l_tile(c_in, c_out, length, itemsize, vmem_budget_bytes)
    grid = (n, pl.cdiv(length, l_tile))

    kernel = functools.partial(
        _fc_block_kernel, group=group, ic_pg=ic_pg, oc_pg=oc_pg)

    return pl.pallas_call(
        kernel,
        out_shape=jax.ShapeDtypeStruct((n, c_out, length), x.dtype),
        grid_spec=pl.GridSpec(
            grid=grid,
            in_specs=[
                # x tile: one batch element, all input channels, one L tile.
                pl.BlockSpec((1, c_in, l_tile), lambda b, l: (b, 0, l)),
                # All weights, untiled -> DMA'd once, VMEM-resident.
                pl.BlockSpec((group, oc_pg, ic_pg), lambda b, l: (0, 0, 0)),
                # All biases, untiled.
                pl.BlockSpec((c_out, 1), lambda b, l: (0, 0)),
            ],
            out_specs=pl.BlockSpec((1, c_out, l_tile), lambda b, l: (b, 0, l)),
        ),
        compiler_params=pltpu.CompilerParams(
            dimension_semantics=("parallel", "parallel"),
        ),
    )(x, w_g, b_2d)


def _reference(x, weight, bias, group):
    # Pure-JAX reference of grouped 1x1 conv1d for verification.
    n, c_in, length = x.shape
    c_out = weight.shape[0]
    ic_pg = c_in // group
    oc_pg = c_out // group
    xg = x.reshape(n, group, ic_pg, length)
    wg = weight.reshape(group, oc_pg, ic_pg)
    out = jnp.einsum("goc,ngcl->ngol", wg, xg)           # (n, g, oc_pg, L)
    out = out.reshape(n, c_out, length) + bias[None, :, None]
    return out


if __name__ == "__main__":
    # Small shapes consistent with the module: batch=2, in_channels=16,
    # out_channels=16, groups=2, seq length=256 (lane-aligned for TPU tiling).
    N, C_IN, C_OUT, GROUP, L = 2, 16, 16, 2, 256

    key = jax.random.PRNGKey(0)
    kx, kw, kb = jax.random.split(key, 3)

    x = jax.random.normal(kx, (N, C_IN, L), dtype=jnp.float32)
    # Conv1d(in, out, k=1, groups=g) weight shape: (C_out, C_in//g, 1); bias: (C_out,)
    fan_in = C_IN // GROUP
    bound = 1.0 / (fan_in ** 0.5)
    weight = jax.random.uniform(kw, (C_OUT, C_IN // GROUP, 1),
                                minval=-bound, maxval=bound, dtype=jnp.float32)
    bias = jax.random.uniform(kb, (C_OUT,), minval=-bound, maxval=bound,
                              dtype=jnp.float32)

    out = fc_block_forward(x, weight, bias, GROUP)
    out = jax.block_until_ready(out)

    ref = _reference(x, weight, bias, GROUP)
    assert out.shape == (N, C_OUT, L)
    assert jnp.allclose(out, ref, atol=1e-5, rtol=1e-5)

    print("KERNEL_OK")
</pallas_src>

<mosaic_0001>
module attributes {stable_mosaic.version = 11 : i64} {
  func.func @_fc_block_kernel(%arg0: i32, %arg1: i32, %arg2: memref<1x16x256xf32, #tpu.memory_space<vmem>>, %arg3: memref<2x8x8xf32, #tpu.memory_space<vmem>>, %arg4: memref<16x1xf32, #tpu.memory_space<vmem>>, %arg5: memref<1x16x256xf32, #tpu.memory_space<vmem>>) attributes {dimension_semantics = [#tpu.dimension_semantics<parallel>, #tpu.dimension_semantics<parallel>], iteration_bounds = array<i64: 2, 1>, scalar_prefetch = 0 : i64, scratch_operands = 0 : i64, tpu.core_type = #tpu.core_type<tc>, window_params = [{transform_indices = @transform_0, window_bounds = array<i64: 1, 16, 256>}, {pipeline_mode = #tpu.pipeline_mode<synchronous>, transform_indices = @transform_1, window_bounds = array<i64: 2, 8, 8>}, {pipeline_mode = #tpu.pipeline_mode<synchronous>, transform_indices = @transform_2, window_bounds = array<i64: 16, 1>}, {transform_indices = @transform_3, window_bounds = array<i64: 1, 16, 256>}]} {
    %c0 = arith.constant 0 : index
    %c0_0 = arith.constant 0 : index
    %c0_1 = arith.constant 0 : index
    %0 = vector.load %arg2[%c0, %c0_0, %c0_1] : memref<1x16x256xf32, #tpu.memory_space<vmem>>, vector<1x8x256xf32>
    %1 = vector.shape_cast %0 : vector<1x8x256xf32> to vector<8x256xf32>
    %c0_2 = arith.constant 0 : index
    %c0_3 = arith.constant 0 : index
    %c0_4 = arith.constant 0 : index
    %2 = vector.load %arg3[%c0_2, %c0_3, %c0_4] : memref<2x8x8xf32, #tpu.memory_space<vmem>>, vector<1x8x8xf32>
    %3 = vector.shape_cast %2 : vector<1x8x8xf32> to vector<8x8xf32>
    %c0_5 = arith.constant 0 : index
    %c0_6 = arith.constant 0 : index
    %4 = vector.load %arg4[%c0_5, %c0_6] : memref<16x1xf32, #tpu.memory_space<vmem>>, vector<8x1xf32>
    %cst = arith.constant dense<0.000000e+00> : vector<8x256xf32>
    %5 = tpu.matmul %3, %1, %cst {dimension_numbers = #tpu.dot_dimension_numbers<[1], [0], [0], [1], [0, 0, 1, 1], [], []>} : vector<8x8xf32>, vector<8x256xf32>, vector<8x256xf32> -> vector<8x256xf32>
    %6 = vector.broadcast %4 : vector<8x1xf32> to vector<8x256xf32>
    %7 = arith.addf %5, %6 : vector<8x256xf32>
    %c0_7 = arith.constant 0 : index
    %c0_8 = arith.constant 0 : index
    %c0_9 = arith.constant 0 : index
    %8 = vector.load %arg5[%c0_7, %c0_8, %c0_9] : memref<1x16x256xf32, #tpu.memory_space<vmem>>, vector<1x8x256xf32>
    %9 = vector.shape_cast %8 : vector<1x8x256xf32> to vector<8x256xf32>
    %10 = vector.shape_cast %7 : vector<8x256xf32> to vector<1x8x256xf32>
    tpu.vector_store %arg5[%c0_7, %c0_8, %c0_9], %10 {strides = array<i32>} : memref<1x16x256xf32, #tpu.memory_space<vmem>>, vector<1x8x256xf32>,
    %c0_10 = arith.constant 0 : index
    %c8 = arith.constant 8 : index
    %c0_11 = arith.constant 0 : index
    %11 = vector.load %arg2[%c0_10, %c8, %c0_11] : memref<1x16x256xf32, #tpu.memory_space<vmem>>, vector<1x8x256xf32>
    %12 = vector.shape_cast %11 : vector<1x8x256xf32> to vector<8x256xf32>
    %c1 = arith.constant 1 : index
    %c0_12 = arith.constant 0 : index
    %c0_13 = arith.constant 0 : index
    %13 = vector.load %arg3[%c1, %c0_12, %c0_13] : memref<2x8x8xf32, #tpu.memory_space<vmem>>, vector<1x8x8xf32>
    %14 = vector.shape_cast %13 : vector<1x8x8xf32> to vector<8x8xf32>
    %c8_14 = arith.constant 8 : index
    %c0_15 = arith.constant 0 : index
    %15 = vector.load %arg4[%c8_14, %c0_15] : memref<16x1xf32, #tpu.memory_space<vmem>>, vector<8x1xf32>
    %cst_16 = arith.constant dense<0.000000e+00> : vector<8x256xf32>
    %16 = tpu.matmul %14, %12, %cst_16 {dimension_numbers = #tpu.dot_dimension_numbers<[1], [0], [0], [1], [0, 0, 1, 1], [], []>} : vector<8x8xf32>, vector<8x256xf32>, vector<8x256xf32> -> vector<8x256xf32>
    %17 = vector.broadcast %15 : vector<8x1xf32> to vector<8x256xf32>
    %18 = arith.addf %16, %17 : vector<8x256xf32>
    %c0_17 = arith.constant 0 : index
    %c8_18 = arith.constant 8 : index
    %c0_19 = arith.constant 0 : index
    %19 = vector.load %arg5[%c0_17, %c8_18, %c0_19] : memref<1x16x256xf32, #tpu.memory_space<vmem>>, vector<1x8x256xf32>
    %20 = vector.shape_cast %19 : vector<1x8x256xf32> to vector<8x256xf32>
    %21 = vector.shape_cast %18 : vector<8x256xf32> to vector<1x8x256xf32>
    tpu.vector_store %arg5[%c0_17, %c8_18, %c0_19], %21 {strides = array<i32>} : memref<1x16x256xf32, #tpu.memory_space<vmem>>, vector<1x8x256xf32>,
    return
  }
  func.func @transform_0(%arg0: i32, %arg1: i32) -> (i32, i32, i32) {
    %c0_i32 = arith.constant 0 : i32
    %c0_i32_0 = arith.constant 0 : i32
    return %arg0, %c0_i32, %arg1 : i32, i32, i32
  }
  func.func @transform_1(%arg0: i32, %arg1: i32) -> (i32, i32, i32) {
    %c0_i32 = arith.constant 0 : i32
    %c0_i32_0 = arith.constant 0 : i32
    %c0_i32_1 = arith.constant 0 : i32
    %c0_i32_2 = arith.constant 0 : i32
    return %c0_i32, %c0_i32_0, %c0_i32_1 : i32, i32, i32
  }
  func.func @transform_2(%arg0: i32, %arg1: i32) -> (i32, i32) {
    %c0_i32 = arith.constant 0 : i32
    %c0_i32_0 = arith.constant 0 : i32
    %c0_i32_1 = arith.constant 0 : i32
    return %c0_i32, %c0_i32_0 : i32, i32
  }
  func.func @transform_3(%arg0: i32, %arg1: i32) -> (i32, i32, i32) {
    %c0_i32 = arith.constant 0 : i32
    %c0_i32_0 = arith.constant 0 : i32
    return %arg0, %c0_i32, %arg1 : i32, i32, i32
  }
}

</mosaic_0001>

<llo_original>
// kernel: tpu_custom_call.1
$region0: #{tpu_custom_call.1}
  #allocation0 [shape = 'u32[]', space=smem, size = 0x4, offset = 0x4, fixed_abs, tag = 'smem constant byte address 0x4 - core index']
  #allocation1 [shape = 'u32[144,128]{1,0:T(1,128)}', space=vmem, size = 0x12000, scoped, tag = 'internal scratch']
  %s0 = inlined_call_operand.hbm [shape: f32[2,16,256], index: 0, kind: input, shape index: {}]
  %s1 = inlined_call_operand.vmem [shape: f32[2,8,8], index: 1, kind: input, shape index: {}]
  %s2 = inlined_call_operand.vmem [shape: f32[16,1], index: 2, kind: input, shape index: {}]
  %s3 = inlined_call_operand.hbm [shape: f32[2,16,256], index: 3, kind: output, shape index: {}]
  %s4 = sld [smem:[#allocation0]]
  $region49: #{tpu_custom_call.1} parent=0
    _
  %s6 = ssub.s32 1, %s4
  %s7 = scalar_select 0, %s6, %s4
  $region1: #{tpu_custom_call.1} parent=0
    #allocation2 [shape = 'u8[32768]{0}', space=vmem, size = 0x8000, scoped, tag = 'input window, operand 0']
    #allocation3 [shape = 's32[2]{0}', space=sflag, size = 0x8, scoped, tag = 'scoped memory for tpu_custom_call.1']
    #allocation4 [shape = 's32[2]{0}', space=sflag, size = 0x8, scoped, tag = 'scoped memory for tpu_custom_call.1']
    #allocation5 [shape = 'u8[32768]{0}', space=vmem, size = 0x8000, scoped, tag = 'output window, operand 0']
    %8 = vsyncpa [#allocation3], 0
    %s9 = scalar_lea.sflag [#allocation3], 1
    %10 = vsyncpa %s9, 0
    %11 = vsyncpa [#allocation4], 0
    %s12 = scalar_lea.sflag [#allocation4], 1
    %13 = vsyncpa %s12, 0
    loop: start=0, step=1, limit=4
    $region2: #{tpu_custom_call.1} parent=1 // loop_pre_header
      _
    $region3: #{tpu_custom_call.1} parent=1 // loop_header
      %s15 = sphi 0, %s19
      %p16 = scmp.ge.s32.totalorder %s15, 4
      %s22 = sphi 0, %s34
      %s23 = sphi 0, %s30
      %s24 = sphi 0, %s22
      %s25 = sphi 0, %s23
      %s26 = sphi 0, %s24
      %s27 = sphi 0, %s25
      %s39 = sphi 0, %s41
      %s42 = sphi 0, %s39
      %s43 = sphi 0, %s42
      %s59 = sphi 0, %s43
      %s63 = sphi 0, %s63
      %s65 = sphi 0, %s63
      %s66 = sphi 0, %s65
      %s80 = sphi 0, %s66
      %s84 = sphi 0, %s84
      %s86 = sphi 0, %s84
      %s87 = sphi 0, %s86
      %s101 = sphi 0, %s87
      %s109 = sphi 0, %s111
      %s112 = sphi 0, %s109
      %s113 = sphi 0, %s112
      %s129 = sphi 0, %s113
    $region4: #{tpu_custom_call.1} parent=1 // loop_header_branch
      %18 = sbr.rel (%p16) target = $region8
    $region5: #{tpu_custom_call.1} parent=1 // loop_body
      %s20 = ssub.s32 %s15, 1
      %s21 = ssub.s32 %s15, 2
      %s28 = sadd.s32 1, %s23
      %p29 = scmp.ge.s32.totalorder %s28, 1
      %s30 = scalar_select %p29, 0, %s28
      %s31 = sadd.s32 1, %s22
      %s32 = scalar_select %p29, %s31, %s22
      %p33 = scmp.ge.s32.totalorder %s32, 2
      %s34 = scalar_select %p33, 0, %s32
      %s35 = ssub.s32 %s22, %s34
      %s36 = ssub.s32 %s23, %s30
      %s37 = sor.u32 %s35, %s36
      %p38 = scmp.eq.s32.totalorder %s37, 0
      %s40 = sadd.s32 %s39, 1
      %s41 = scalar_select %p38, %s39, %s40
      %p44 = pneg %p38
      %p45 = scmp.eq.s32.totalorder %s15, 1
      %p46 = por %p44, %p45
      %p47 = scmp.ne.s32.totalorder %s39, %s42
      %p48 = scmp.eq.s32.totalorder %s15, 0
      %p49 = por %p47, %p48
      %p50 = scmp.ne.s32.totalorder %s39, %s42
      %p51 = scmp.eq.s32.totalorder %s20, 1
      %p52 = por %p50, %p51
      %p53 = scmp.ne.s32.totalorder %s42, %s43
      %p54 = scmp.eq.s32.totalorder %s20, 0
      %p55 = por %p53, %p54
      %p56 = scmp.ne.s32.totalorder %s42, %s43
      %p57 = scmp.eq.s32.totalorder %s21, 1
      %p58 = por %p56, %p57
      %p60 = scmp.ne.s32.totalorder %s43, %s59
      %p61 = scmp.eq.s32.totalorder %s21, 0
      %p62 = por %p60, %p61
      %s64 = sadd.s32 %s63, 1
      %p67 = scmp.eq.s32.totalorder %s15, 1
      %p68 = scmp.ne.s32.totalorder %s63, %s65
      %p69 = scmp.eq.s32.totalorder %s15, 0
      %p70 = por %p68, %p69
      %p71 = scmp.ne.s32.totalorder %s63, %s65
      %p72 = scmp.eq.s32.totalorder %s20, 1
      %p73 = por %p71, %p72
      %p74 = scmp.ne.s32.totalorder %s65, %s66
      %p75 = scmp.eq.s32.totalorder %s20, 0
      %p76 = por %p74, %p75
      %p77 = scmp.ne.s32.totalorder %s65, %s66
      %p78 = scmp.eq.s32.totalorder %s21, 1
      %p79 = por %p77, %p78
      %p81 = scmp.ne.s32.totalorder %s66, %s80
      %p82 = scmp.eq.s32.totalorder %s21, 0
      %p83 = por %p81, %p82
      %s85 = sadd.s32 %s84, 1
      %p88 = scmp.eq.s32.totalorder %s15, 1
      %p89 = scmp.ne.s32.totalorder %s84, %s86
      %p90 = scmp.eq.s32.totalorder %s15, 0
      %p91 = por %p89, %p90
      %p92 = scmp.ne.s32.totalorder %s84, %s86
      %p93 = scmp.eq.s32.totalorder %s20, 1
      %p94 = por %p92, %p93
      %p95 = scmp.ne.s32.totalorder %s86, %s87
      %p96 = scmp.eq.s32.totalorder %s20, 0
      %p97 = por %p95, %p96
      %p98 = scmp.ne.s32.totalorder %s86, %s87
      %p99 = scmp.eq.s32.totalorder %s21, 1
      %p100 = por %p98, %p99
      %p102 = scmp.ne.s32.totalorder %s87, %s101
      %p103 = scmp.eq.s32.totalorder %s21, 0
      %p104 = por %p102, %p103
      %s105 = ssub.s32 %s22, %s34
      %s106 = ssub.s32 %s23, %s30
      %s107 = sor.u32 %s105, %s106
      %p108 = scmp.eq.s32.totalorder %s107, 0
      %s110 = sadd.s32 %s109, 1
      %s111 = scalar_select %p108, %s109, %s110
      %p114 = pneg %p108
      %p115 = scmp.eq.s32.totalorder %s15, 1
      %p116 = por %p114, %p115
      %p117 = scmp.ne.s32.totalorder %s109, %s112
      %p118 = scmp.eq.s32.totalorder %s15, 0
      %p119 = por %p117, %p118
      %p120 = scmp.ne.s32.totalorder %s109, %s112
      %p121 = scmp.eq.s32.totalorder %s20, 1
      %p122 = por %p120, %p121
      %p123 = scmp.ne.s32.totalorder %s112, %s113
      %p124 = scmp.eq.s32.totalorder %s20, 0
      %p125 = por %p123, %p124
      %p126 = scmp.ne.s32.totalorder %s112, %s113
      %p127 = scmp.eq.s32.totalorder %s21, 1
      %p128 = por %p126, %p127
      %p130 = scmp.ne.s32.totalorder %s113, %s129
      %p131 = scmp.eq.s32.totalorder %s21, 0
      %p132 = por %p130, %p131
      %p133 = scmp.le.s32.totalorder 1, %s15
      %p134 = scmp.lt.s32.totalorder %s15, 3
      %p135 = pnand %p133, %p134
      %p136 = pneg %p135
      // Predicated region
      $region9: #{tpu_custom_call.1} parent=5 // pred_check
        _
      $region10: #{tpu_custom_call.1} parent=5 // pred_check_branch
        %138 = sbr.rel (%p135) target = $region12
      $region11: #{tpu_custom_call.1} parent=5 // pred_region
        %s139 = ssub.s32 %s15, 1
        // Predicated region
        $region13: #{tpu_custom_call.1} parent=11 // pred_check
          %p140 = pneg %p76
        $region14: #{tpu_custom_call.1} parent=11 // pred_check_branch
          %142 = sbr.rel (%p140) target = $region16
        $region15: #{tpu_custom_call.1} parent=11 // pred_region
          _
        $region16: #{tpu_custom_call.1} parent=11 // pred_fallthru
          _
        // Predicated region
        $region17: #{tpu_custom_call.1} parent=11 // pred_check
          %p143 = pneg %p97
        $region18: #{tpu_custom_call.1} parent=11 // pred_check_branch
          %145 = sbr.rel (%p143) target = $region20
        $region19: #{tpu_custom_call.1} parent=11 // pred_region
          _
        $region20: #{tpu_custom_call.1} parent=11 // pred_fallthru
          _
      $region12: #{tpu_custom_call.1} parent=5 // pred_fallthru
        _
      %p146 = scmp.lt.s32.totalorder %s15, 2
      // Predicated region
      $region21: #{tpu_custom_call.1} parent=5 // pred_check
        %p147 = pneg %p146
      $region22: #{tpu_custom_call.1} parent=5 // pred_check_branch
        %149 = sbr.rel (%p147) target = $region24
      $region23: #{tpu_custom_call.1} parent=5 // pred_region
        // Predicated region
        $region25: #{tpu_custom_call.1} parent=23 // pred_check
          %p150 = pneg %p49
        $region26: #{tpu_custom_call.1} parent=23 // pred_check_branch
          %152 = sbr.rel (%p150) target = $region28
        $region27: #{tpu_custom_call.1} parent=23 // pred_region
          %s153 = sand.u32 %s39, 1
          %s154 = scalar_lea.sflag [#allocation3], %s153
          %s155 = sand.u32 %s39, 1
          %s156 = smul.addr %s155, 32
          %s157 = scalar_lea.vmem [#allocation2], %s156
          %s158 = smul.u32 2, %s23
          %s160 = ssub.s32 512, 512
          %161 = vsyncadd %s154, %s160
          %s162 = smul.addr %s22, 4
          %s163 = sadd.s32 %s158, %s162
          %s164 = smul.addr %s163, 128
          %s165 = scalar_lea.hbm %s0, %s164
          %s166 = sshll.u32 %s157, 4
          %s167 = int_to_ptr.vmem [resolvable:$true] %s166
          %172 = dma.hbm_to_vmem [thread:$0]  %s165, 512, %s167, %s154, 256, 256, 16
        $region28: #{tpu_custom_call.1} parent=23 // pred_fallthru
          _
      $region24: #{tpu_custom_call.1} parent=5 // pred_fallthru
        _
      %p173 = scmp.le.s32.totalorder 1, %s15
      %p174 = scmp.lt.s32.totalorder %s15, 3
      %p175 = pnand %p173, %p174
      %p176 = pneg %p175
      // Predicated region
      $region29: #{tpu_custom_call.1} parent=5 // pred_check
        _
      $region30: #{tpu_custom_call.1} parent=5 // pred_check_branch
        %178 = sbr.rel (%p175) target = $region32
      $region31: #{tpu_custom_call.1} parent=5 // pred_region
        %s179 = ssub.s32 %s15, 1
        %s180 = sand.u32 %s42, 1
        %s181 = scalar_lea.sflag [#allocation3], %s180
        %s182 = sand.u32 %s42, 1
        %s183 = smul.addr %s182, 32
        %s184 = scalar_lea.vmem [#allocation2], %s183
        // Predicated region
        $region33: #{tpu_custom_call.1} parent=31 // pred_check
          %p185 = pneg %p55
        $region34: #{tpu_custom_call.1} parent=31 // pred_check_branch
          %187 = sbr.rel (%p185) target = $region36
        $region35: #{tpu_custom_call.1} parent=31 // pred_region
          %188 = dma.done %s181, 512
        $region36: #{tpu_custom_call.1} parent=31 // pred_fallthru
          _
        %s189 = sand.u32 %s42, 1
        %s190 = scalar_lea.sflag [#allocation3], %s189
        %s191 = sand.u32 %s42, 1
        %s192 = smul.addr %s191, 32
        %s193 = scalar_lea.vmem [#allocation2], %s192
        %p194 = pneg %p55
        %p195 = pneg %p52
        %p196 = pneg %p76
        %p197 = pneg %p73
        %p198 = pneg %p97
        %p199 = pneg %p94
        %p200 = pneg %p125
        %p201 = pneg %p122
        %s202 = sand.u32 %s112, 1
        %s203 = scalar_lea.sflag [#allocation4], %s202
        %s204 = sand.u32 %s112, 1
        %s205 = smul.addr %s204, 32
        %s206 = scalar_lea.vmem [#allocation5], %s205
        %s207 = smul.u32 2, %s25
        %s208 = smul.u32 2, %s25
        %v209 = vld [vmem:[%s184] sm:$0xff]
        %v210 = vld [vmem:[%s184 + $0x8] sm:$0xff]
        %v211 = vld [vmem:[%s1] sm:$0xff]
        %v212 = vld [vmem:[%s2] sm:$0xff]
        %214 = vset.pattern.permute.xlu0 0
        %215 = vperm.xlu0 %214, %v212
        %v216 = vpop.permute.xlu0 %215
        %vm218 = vcmask 64512
        %v220 = vsel %vm218, %v211, 0
        %222 = vmatprep.subr.mxu0 %v210
        %223 = vmatpush1.msra.mxu0 %v209
        %224 = vmatprep.subr.mxu0 0.0
        %225 = vmatpush1.msra.mxu0 0.0
        %226 = vmatprep.subr.mxu0 0.0
        %227 = vmatpush1.msra.mxu0 0.0
        %228 = vmatprep.subr.mxu0 0.0
        %229 = vmatpush1.msra.mxu0 0.0
        %230 = vmatprep.subr.mxu0 0.0
        %231 = vmatpush1.msra.mxu0 0.0
        %232 = vmatprep.subr.mxu0 0.0
        %233 = vmatpush1.msra.mxu0 0.0
        %234 = vmatprep.subr.mxu0 0.0
        %235 = vmatpush1.msra.mxu0 0.0
        %236 = vmatprep.subr.mxu0 0.0
        %237 = vmatpush1.msra.mxu0 0.0
        %238 = vmatprep.subr.mxu0 0.0
        %239 = vmatpush1.msra.mxu0 0.0
        %240 = vmatprep.subr.mxu0 0.0
        %241 = vmatpush1.msra.mxu0 0.0
        %242 = vmatprep.subr.mxu0 0.0
        %243 = vmatpush1.msra.mxu0 0.0
        %244 = vmatprep.subr.mxu0 0.0
        %245 = vmatpush1.msra.mxu0 0.0
        %246 = vmatprep.subr.mxu0 0.0
        %247 = vmatpush1.msra.mxu0 0.0
        %248 = vmatprep.subr.mxu0 0.0
        %249 = vmatpush1.msra.mxu0 0.0
        %250 = vmatprep.subr.mxu0 0.0
        %251 = vmatpush1.msra.mxu0 0.0
        %252 = vmatprep.subr.mxu0 0.0
        %253 = vmatpush1.msra.mxu0 0.0
        %254 = vmatprep.subr.mxu0 0.0
        %255 = vmatpush1.msra.mxu0 0.0
        %256 = vmatprep.subr.mxu0 0.0
        %257 = vmatpush1.msra.mxu0 0.0
        %258 = vmatprep.subr.mxu0 0.0
        %259 = vmatpush1.msra.mxu0 0.0
        %260 = vmatprep.subr.mxu0 0.0
        %261 = vmatpush1.msra.mxu0 0.0
        %262 = vmatprep.subr.mxu0 0.0
        %263 = vmatpush1.msra.mxu0 0.0
        %264 = vmatprep.subr.mxu0 0.0
        %265 = vmatpush1.msra.mxu0 0.0
        %266 = vmatprep.subr.mxu0 0.0
        %267 = vmatpush1.msra.mxu0 0.0
        %268 = vmatprep.subr.mxu0 0.0
        %269 = vmatpush1.msra.mxu0 0.0
        %270 = vmatprep.subr.mxu0 0.0
        %271 = vmatpush1.msra.mxu0 0.0
        %272 = vmatprep.subr.mxu0 0.0
        %273 = vmatpush1.msra.mxu0 0.0
        %274 = vmatprep.subr.mxu0 0.0
        %275 = vmatpush1.msra.mxu0 0.0
        %276 = vmatprep.subr.mxu0 0.0
        %277 = vmatpush1.msra.mxu0 0.0
        %278 = vmatprep.subr.mxu0 0.0
        %279 = vmatpush1.msra.mxu0 0.0
        %280 = vmatprep.subr.mxu0 0.0
        %281 = vmatpush1.msra.mxu0 0.0
        %282 = vmatprep.subr.mxu0 0.0
        %283 = vmatpush1.msra.mxu0 0.0
        %284 = vmatprep.subr.mxu0 0.0
        %285 = vmatpush1.msra.mxu0 0.0
        %286 = vmatprep.mubr.f32.mxu0 0.0
        %287 = vmatmul.mubr.f32.gmra.mrb[0].mxu0 %v220
        %v288 = vpop.f32.mrb[0].mxu0
        %v289 = vadd.f32 %v216, %v288
        %v290 = vpop.f32.mrb[0].mxu0
        %v291 = vadd.f32 %v216, %v290
        %292 = vdwg.mxu0
        %293 = vst [vmem:[%s206] sm:$0xff] %v289
        %294 = vst [vmem:[%s206 + $0x8] sm:$0xff] %v291
        %v295 = vld [vmem:[%s184 + $0x10] sm:$0xff]
        %v296 = vld [vmem:[%s184 + $0x18] sm:$0xff]
        %s297 = scalar_lea.vmem %s1, 8
        %v298 = vld [vmem:[%s297] sm:$0xff]
        %v299 = vld [vmem:[%s2 + $0x8] sm:$0xff]
        %301 = vset.pattern.permute.xlu0 0
        %302 = vperm.xlu0 %301, %v299
        %v303 = vpop.permute.xlu0 %302
        %v306 = vsel %vm218, %v298, 0
        %308 = vmatprep.subr.mxu0 %v296
        %309 = vmatpush1.msra.mxu0 %v295
        %310 = vmatprep.subr.mxu0 0.0
        %311 = vmatpush1.msra.mxu0 0.0
        %312 = vmatprep.subr.mxu0 0.0
        %313 = vmatpush1.msra.mxu0 0.0
        %314 = vmatprep.subr.mxu0 0.0
        %315 = vmatpush1.msra.mxu0 0.0
        %316 = vmatprep.subr.mxu0 0.0
        %317 = vmatpush1.msra.mxu0 0.0
        %318 = vmatprep.subr.mxu0 0.0
        %319 = vmatpush1.msra.mxu0 0.0
        %320 = vmatprep.subr.mxu0 0.0
        %321 = vmatpush1.msra.mxu0 0.0
        %322 = vmatprep.subr.mxu0 0.0
        %323 = vmatpush1.msra.mxu0 0.0
        %324 = vmatprep.subr.mxu0 0.0
        %325 = vmatpush1.msra.mxu0 0.0
        %326 = vmatprep.subr.mxu0 0.0
        %327 = vmatpush1.msra.mxu0 0.0
        %328 = vmatprep.subr.mxu0 0.0
        %329 = vmatpush1.msra.mxu0 0.0
        %330 = vmatprep.subr.mxu0 0.0
        %331 = vmatpush1.msra.mxu0 0.0
        %332 = vmatprep.subr.mxu0 0.0
        %333 = vmatpush1.msra.mxu0 0.0
        %334 = vmatprep.subr.mxu0 0.0
        %335 = vmatpush1.msra.mxu0 0.0
        %336 = vmatprep.subr.mxu0 0.0
        %337 = vmatpush1.msra.mxu0 0.0
        %338 = vmatprep.subr.mxu0 0.0
        %339 = vmatpush1.msra.mxu0 0.0
        %340 = vmatprep.subr.mxu0 0.0
        %341 = vmatpush1.msra.mxu0 0.0
        %342 = vmatprep.subr.mxu0 0.0
        %343 = vmatpush1.msra.mxu0 0.0
        %344 = vmatprep.subr.mxu0 0.0
        %345 = vmatpush1.msra.mxu0 0.0
        %346 = vmatprep.subr.mxu0 0.0
        %347 = vmatpush1.msra.mxu0 0.0
        %348 = vmatprep.subr.mxu0 0.0
        %349 = vmatpush1.msra.mxu0 0.0
        %350 = vmatprep.subr.mxu0 0.0
        %351 = vmatpush1.msra.mxu0 0.0
        %352 = vmatprep.subr.mxu0 0.0
        %353 = vmatpush1.msra.mxu0 0.0
        %354 = vmatprep.subr.mxu0 0.0
        %355 = vmatpush1.msra.mxu0 0.0
        %356 = vmatprep.subr.mxu0 0.0
        %357 = vmatpush1.msra.mxu0 0.0
        %358 = vmatprep.subr.mxu0 0.0
        %359 = vmatpush1.msra.mxu0 0.0
        %360 = vmatprep.subr.mxu0 0.0
        %361 = vmatpush1.msra.mxu0 0.0
        %362 = vmatprep.subr.mxu0 0.0
        %363 = vmatpush1.msra.mxu0 0.0
        %364 = vmatprep.subr.mxu0 0.0
        %365 = vmatpush1.msra.mxu0 0.0
        %366 = vmatprep.subr.mxu0 0.0
        %367 = vmatpush1.msra.mxu0 0.0
        %368 = vmatprep.subr.mxu0 0.0
        %369 = vmatpush1.msra.mxu0 0.0
        %370 = vmatprep.subr.mxu0 0.0
        %371 = vmatpush1.msra.mxu0 0.0
        %372 = vmatprep.mubr.f32.mxu0 0.0
        %373 = vmatmul.mubr.f32.gmra.mrb[0].mxu0 %v306
        %v374 = vpop.f32.mrb[0].mxu0
        %v375 = vadd.f32 %v303, %v374
        %v376 = vpop.f32.mrb[0].mxu0
        %v377 = vadd.f32 %v303, %v376
        %378 = vdwg.mxu0
        %379 = vst [vmem:[%s206 + $0x10] sm:$0xff] %v375
        %380 = vst [vmem:[%s206 + $0x18] sm:$0xff] %v377
        %s381 = sand.u32 %s112, 1
        %s382 = scalar_lea.sflag [#allocation4], %s381
        %s383 = sand.u32 %s112, 1
        %s384 = smul.addr %s383, 32
        %s385 = scalar_lea.vmem [#allocation5], %s384
        // Predicated region
        $region37: #{tpu_custom_call.1} parent=31 // pred_check
          %p386 = pneg %p122
        $region38: #{tpu_custom_call.1} parent=31 // pred_check_branch
          %388 = sbr.rel (%p386) target = $region40
        $region39: #{tpu_custom_call.1} parent=31 // pred_region
          %s389 = smul.u32 2, %s25
          %s391 = ssub.s32 512, 512
          %392 = vsyncadd %s382, %s391
          %s393 = smul.addr %s24, 4
          %s394 = sadd.s32 %s389, %s393
          %s395 = smul.addr %s394, 128
          %s396 = scalar_lea.hbm %s3, %s395
          %s397 = sshll.u32 %s385, 4
          %s398 = int_to_ptr.vmem [resolvable:$true] %s397
          %403 = dma.vmem_to_hbm [thread:$0]  %s398, 512, %s396, %s382, 256, 256, 16
        $region40: #{tpu_custom_call.1} parent=31 // pred_fallthru
          _
      $region32: #{tpu_custom_call.1} parent=5 // pred_fallthru
        _
      %p404 = scmp.le.s32.totalorder 2, %s15
      // Predicated region
      $region41: #{tpu_custom_call.1} parent=5 // pred_check
        %p405 = pneg %p404
      $region42: #{tpu_custom_call.1} parent=5 // pred_check_branch
        %407 = sbr.rel (%p405) target = $region44
      $region43: #{tpu_custom_call.1} parent=5 // pred_region
        %s408 = ssub.s32 %s15, 2
        // Predicated region
        $region45: #{tpu_custom_call.1} parent=43 // pred_check
          %p409 = pneg %p128
        $region46: #{tpu_custom_call.1} parent=43 // pred_check_branch
          %411 = sbr.rel (%p409) target = $region48
        $region47: #{tpu_custom_call.1} parent=43 // pred_region
          %s412 = sand.u32 %s113, 1
          %s413 = scalar_lea.sflag [#allocation4], %s412
          %s414 = sand.u32 %s113, 1
          %s415 = smul.addr %s414, 32
          %s416 = scalar_lea.vmem [#allocation5], %s415
          %417 = dma.done %s413, 512
        $region48: #{tpu_custom_call.1} parent=43 // pred_fallthru
          _
      $region44: #{tpu_custom_call.1} parent=5 // pred_fallthru
        _
    $region6: #{tpu_custom_call.1} parent=1 // loop_footer
      %s19 = sadd.s32 1, %s15
    $region7: #{tpu_custom_call.1} parent=1 // loop_footer_branch
      %14 = sbr.rel target = $region3
    $region8: #{tpu_custom_call.1} parent=1 // loop_exit
      _
    %418 = vsyncpa [#allocation3], 1
    %s419 = scalar_lea.sflag [#allocation3], 1
    %420 = vsyncpa %s419, 1
    %421 = vsyncpa [#allocation4], 1
    %s422 = scalar_lea.sflag [#allocation4], 1
    %423 = vsyncpa %s422, 1

</llo_original>
